<compile_context>
chip_gen: v6e
topology: v6e:2x2x1
jax: 0.10.0
libtpu: 0.0.40
codegen_flags: <defaults>
</compile_context>

<pallas_src>
import jax
import jax.numpy as jnp
from jax.experimental import pallas as pl
from jax.experimental.pallas import tpu as pltpu


def _inv1x1_kernel(w_ref, z_ref, o_ref):
    # w_ref: (c, c) resident weight.  z_ref / o_ref: (b_blk, c, tile_t).
    # out[b, i, t] = sum_j W[i, j] * z[b, j, t]
    # Broadcast W over the folded batch dim so the contraction lowers as a
    # standard batched dot_general (batch dims on both operands, MXU path).
    b_blk = z_ref.shape[0]
    w = jnp.broadcast_to(w_ref[...], (b_blk,) + w_ref.shape)
    o_ref[...] = jnp.einsum(
        "bij,bjt->bit", w, z_ref[...],
        preferred_element_type=jnp.float32,
    ).astype(o_ref.dtype)


def invertible_1x1_conv_forward(z, W, *, target_block_bytes=2 * 1024 * 1024):
    """Forward pass of Invertible1x1Conv (reverse=False).

    Args:
      z: (batch, c, n_groups) float32
      W: (c, c) float32 orthogonal weight (squeezed Conv1d weight)
      target_block_bytes: target size of one z block (~1-4 MiB keeps the
        pipeline at HBM roofline while fitting every generation's default
        scoped VMEM once double-buffered).

    Returns:
      (z_out, log_det_W) matching the PyTorch module's outputs.
    """
    batch, c, n_groups = z.shape
    itemsize = jnp.dtype(z.dtype).itemsize
    elems_budget = max(1, target_block_bytes // itemsize)

    # ---- time tile: lane-dense (multiple of 128) or the full (short) axis ---
    if n_groups < 128:
        tile_t = n_groups                       # full dim: legal for any size
    else:
        tile_t_cap = max(128, ((elems_budget // c) // 128) * 128)
        tile_t = min(tile_t_cap, (n_groups // 128) * 128)
    n_t = pl.cdiv(n_groups, tile_t)             # last tile may be ragged (masked)

    # ---- fold batch into the block until the ~target_block_bytes budget -----
    blk_elems = c * tile_t
    desired_b = int(max(1, min(batch, elems_budget // max(1, blk_elems))))
    b_blk = 1
    for d in range(min(desired_b, batch), 0, -1):   # largest divisor of batch
        if batch % d == 0:
            b_blk = d
            break
    n_b = batch // b_blk

    # Advisory cost: true (unpadded) traffic; this call is memory-bound.
    cost = pl.CostEstimate(
        flops=2 * batch * c * c * n_groups,
        transcendentals=0,
        bytes_accessed=(2 * batch * c * n_groups + c * c) * itemsize,
    )

    z_out = pl.pallas_call(
        _inv1x1_kernel,
        out_shape=jax.ShapeDtypeStruct((batch, c, n_groups), z.dtype),
        grid_spec=pltpu.PrefetchScalarGridSpec(
            num_scalar_prefetch=0,
            grid=(n_b, n_t),
            in_specs=[
                # W: tiny, DMA'd once and resident across all grid steps.
                pl.BlockSpec((c, c), lambda b, t: (0, 0)),
                # z[b*b_blk : (b+1)*b_blk, :, t*tile_t : (t+1)*tile_t]
                pl.BlockSpec((b_blk, c, tile_t), lambda b, t: (b, 0, t)),
            ],
            out_specs=pl.BlockSpec((b_blk, c, tile_t), lambda b, t: (b, 0, t)),
        ),
        compiler_params=pltpu.CompilerParams(
            # Both axes independent -> v7x's two TCs each take a shard;
            # neutral on v5e/v6e (single TC).
            dimension_semantics=("parallel", "parallel"),
        ),
        cost_estimate=cost,
    )(W, z)

    # Parameter-only scalar: logdet of the c x c weight (plain JAX glue).
    # NOTE: logabsdet + log(sign) is NaN for det(W) < 0, matching torch.logdet;
    # the module's orthogonal init guarantees det(W) > 0 so sign == 1 here.
    sign, logabsdet = jnp.linalg.slogdet(W)
    log_det_W = (batch * n_groups) * (logabsdet + jnp.log(sign))
    return z_out, log_det_W


def make_weight(c, key):
    """Deterministic orthogonal init matching the PyTorch __init__:
    QR of a normal(c, c) matrix, with det forced positive by flipping col 0."""
    A = jax.random.normal(key, (c, c), dtype=jnp.float32)
    Q, _ = jnp.linalg.qr(A)
    det = jnp.linalg.det(Q)
    Q = jnp.where(det < 0, Q.at[:, 0].set(-Q[:, 0]), Q)
    return Q  # (c, c); PyTorch stores it as (c, c, 1) conv weight


if __name__ == "__main__":
    key = jax.random.PRNGKey(0)
    k_w1, k_z1, k_w2, k_z2, k_w3, k_z3 = jax.random.split(key, 6)

    # Case 1: tiny module-like shape (n_groups < 128 -> full-time block,
    # batch folded into the block; no padding, no slicing).
    batch, c, n_groups = 2, 4, 8
    W1 = make_weight(c, k_w1)
    z1 = jax.random.normal(k_z1, (batch, c, n_groups), dtype=jnp.float32)
    out1, ld1 = invertible_1x1_conv_forward(z1, W1)
    jax.block_until_ready(out1)
    jax.block_until_ready(ld1)
    ref1 = jnp.einsum("ij,bjt->bit", W1, z1)
    assert out1.shape == (batch, c, n_groups)
    assert ld1.shape == ()
    assert jnp.allclose(out1, ref1, atol=1e-5), "mismatch vs reference (case 1)"
    ref_ld1 = (batch * n_groups) * jnp.linalg.slogdet(W1)[1]
    assert jnp.allclose(ld1, ref_ld1, atol=1e-4), "logdet mismatch (case 1)"

    # Case 2: aligned time axis; small block budget forces b_blk=1 and a grid
    # over batch (exercises the time-tiled / per-batch path).
    b2, c2, t2 = 2, 8, 256
    W2 = make_weight(c2, k_w2)
    z2 = jax.random.normal(k_z2, (b2, c2, t2), dtype=jnp.float32)
    out2, _ = invertible_1x1_conv_forward(z2, W2, target_block_bytes=8192)
    jax.block_until_ready(out2)
    ref2 = jnp.einsum("ij,bjt->bit", W2, z2)
    assert jnp.allclose(out2, ref2, atol=1e-5), "mismatch vs reference (case 2)"

    # Case 3: ragged last time tile (300 = 256 + 44) with the default budget —
    # no wrapper pad/slice; Pallas masks the final tile's stores.
    b3, c3, t3 = 2, 8, 300
    W3 = make_weight(c3, k_w3)
    z3 = jax.random.normal(k_z3, (b3, c3, t3), dtype=jnp.float32)
    out3, _ = invertible_1x1_conv_forward(z3, W3)
    jax.block_until_ready(out3)
    ref3 = jnp.einsum("ij,bjt->bit", W3, z3)
    assert jnp.allclose(out3, ref3, atol=1e-5), "mismatch vs reference (case 3)"

    print("KERNEL_OK")
</pallas_src>

<mosaic_0001>
module attributes {stable_mosaic.version = 11 : i64} {
  func.func @_inv1x1_kernel(%arg0: i32, %arg1: i32, %arg2: memref<4x4xf32, #tpu.memory_space<vmem>>, %arg3: memref<2x4x8xf32, #tpu.memory_space<vmem>>, %arg4: memref<2x4x8xf32, #tpu.memory_space<vmem>>) attributes {dimension_semantics = [#tpu.dimension_semantics<parallel>, #tpu.dimension_semantics<parallel>], iteration_bounds = array<i64: 1, 1>, scalar_prefetch = 0 : i64, scratch_operands = 0 : i64, tpu.core_type = #tpu.core_type<tc>, window_params = [{pipeline_mode = #tpu.pipeline_mode<synchronous>, transform_indices = @transform_0, window_bounds = array<i64: 4, 4>}, {transform_indices = @transform_1, window_bounds = array<i64: 2, 4, 8>}, {transform_indices = @transform_2, window_bounds = array<i64: 2, 4, 8>}]} {
    %c0 = arith.constant 0 : index
    %c0_0 = arith.constant 0 : index
    %0 = vector.load %arg2[%c0, %c0_0] : memref<4x4xf32, #tpu.memory_space<vmem>>, vector<4x4xf32>
    %1 = vector.shape_cast %0 : vector<4x4xf32> to vector<1x4x4xf32>
    %2 = vector.broadcast %1 : vector<1x4x4xf32> to vector<2x4x4xf32>
    %c0_1 = arith.constant 0 : index
    %c0_2 = arith.constant 0 : index
    %c0_3 = arith.constant 0 : index
    %3 = vector.load %arg3[%c0_1, %c0_2, %c0_3] : memref<2x4x8xf32, #tpu.memory_space<vmem>>, vector<2x4x8xf32>
    "tpu.trace_start"() <{level = 10 : i32, message = "bij,bjt->bit"}> : () -> ()
    %cst = arith.constant dense<0.000000e+00> : vector<2x4x8xf32>
    %4 = tpu.matmul %2, %3, %cst {dimension_numbers = #tpu.dot_dimension_numbers<[2], [1], [1], [2], [0, 0, 0, 1, 1, 2], [0], [0]>} : vector<2x4x4xf32>, vector<2x4x8xf32>, vector<2x4x8xf32> -> vector<2x4x8xf32>
    "tpu.trace_stop"() : () -> ()
    %c0_4 = arith.constant 0 : index
    %c0_5 = arith.constant 0 : index
    %c0_6 = arith.constant 0 : index
    %5 = vector.load %arg4[%c0_4, %c0_5, %c0_6] : memref<2x4x8xf32, #tpu.memory_space<vmem>>, vector<2x4x8xf32>
    tpu.vector_store %arg4[%c0_4, %c0_5, %c0_6], %4 {strides = array<i32>} : memref<2x4x8xf32, #tpu.memory_space<vmem>>, vector<2x4x8xf32>,
    return
  }
  func.func @transform_0(%arg0: i32, %arg1: i32) -> (i32, i32) {
    %c0_i32 = arith.constant 0 : i32
    %c0_i32_0 = arith.constant 0 : i32
    %c0_i32_1 = arith.constant 0 : i32
    return %c0_i32, %c0_i32_0 : i32, i32
  }
  func.func @transform_1(%arg0: i32, %arg1: i32) -> (i32, i32, i32) {
    %c0_i32 = arith.constant 0 : i32
    %c0_i32_0 = arith.constant 0 : i32
    return %arg0, %c0_i32, %arg1 : i32, i32, i32
  }
  func.func @transform_2(%arg0: i32, %arg1: i32) -> (i32, i32, i32) {
    %c0_i32 = arith.constant 0 : i32
    %c0_i32_0 = arith.constant 0 : i32
    return %arg0, %c0_i32, %arg1 : i32, i32, i32
  }
}

</mosaic_0001>

<llo_original>
// kernel: tpu_custom_call.1
$region0: #{tpu_custom_call.1}
  #allocation0 [shape = 'u32[]', space=smem, size = 0x4, offset = 0x4, fixed_abs, tag = 'smem constant byte address 0x4 - core index']
  #allocation1 [shape = 'u32[144,128]{1,0:T(1,128)}', space=vmem, size = 0x12000, scoped, tag = 'internal scratch']
  %s0 = inlined_call_operand.hbm [shape: f32[4,4], index: 0, kind: input, shape index: {}]
  %s1 = inlined_call_operand.hbm [shape: f32[2,4,8], index: 1, kind: input, shape index: {}]
  %s2 = inlined_call_operand.hbm [shape: f32[2,4,8], index: 2, kind: output, shape index: {}]
  %s3 = sld [smem:[#allocation0]]
  $region26: #{tpu_custom_call.1} parent=0
    _
  %s5 = ssub.s32 1, %s3
  %s6 = scalar_select 0, %s5, %s3
  $region1: #{tpu_custom_call.1} parent=0
    #allocation2 [shape = 'u8[2048]{0}', space=vmem, size = 0x800, scoped, tag = 'input window, operand 0, single buffered']
    #allocation3 [shape = 's32[1]{0}', space=sflag, size = 0x4, scoped, tag = 'scoped memory for tpu_custom_call.1']
    #allocation4 [shape = 's32[1]{0}', space=sflag, size = 0x4, scoped, tag = 'scoped memory for tpu_custom_call.1']
    #allocation5 [shape = 'u8[4096]{0}', space=vmem, size = 0x1000, scoped, tag = 'input window, operand 1, single buffered']
    #allocation6 [shape = 's32[1]{0}', space=sflag, size = 0x4, scoped, tag = 'scoped memory for tpu_custom_call.1']
    #allocation7 [shape = 'u8[4096]{0}', space=vmem, size = 0x1000, scoped, tag = 'output window, operand 0, single buffered']
    %7 = vsyncpa [#allocation3], 0
    %8 = vsyncpa [#allocation6], 0
    %9 = vsyncpa [#allocation4], 0
    // Predicated region
    $region2: #{tpu_custom_call.1} parent=1 // pred_check
      _
    $region3: #{tpu_custom_call.1} parent=1 // pred_check_branch
      %11 = sbr.rel (0) target = $region5
    $region4: #{tpu_custom_call.1} parent=1 // pred_region
      %s13 = ssub.s32 64, 64
      %14 = vsyncadd [#allocation3], %s13
      %s16 = sshll.u32 [#allocation2], 4
      %s17 = int_to_ptr.vmem [resolvable:$true] %s16
      %19 = dma.hbm_to_vmem [thread:$0]  %s0, 64, %s17, [#allocation3]
    $region5: #{tpu_custom_call.1} parent=1 // pred_fallthru
      _
    // Predicated region
    $region6: #{tpu_custom_call.1} parent=1 // pred_check
      _
    $region7: #{tpu_custom_call.1} parent=1 // pred_check_branch
      %21 = sbr.rel (0) target = $region9
    $region8: #{tpu_custom_call.1} parent=1 // pred_region
      %s23 = ssub.s32 128, 128
      %24 = vsyncadd [#allocation6], %s23
      %s25 = sshll.u32 [#allocation5], 4
      %s26 = int_to_ptr.vmem [resolvable:$true] %s25
      %31 = dma.hbm_to_vmem [thread:$0]  %s1, 128, %s26, [#allocation6], 64, 64, 4
    $region9: #{tpu_custom_call.1} parent=1 // pred_fallthru
      _
    // Predicated region
    $region10: #{tpu_custom_call.1} parent=1 // pred_check
      _
    $region11: #{tpu_custom_call.1} parent=1 // pred_check_branch
      %33 = sbr.rel (0) target = $region13
    $region12: #{tpu_custom_call.1} parent=1 // pred_region
      %34 = dma.done [#allocation3], 64
    $region13: #{tpu_custom_call.1} parent=1 // pred_fallthru
      _
    // Predicated region
    $region14: #{tpu_custom_call.1} parent=1 // pred_check
      _
    $region15: #{tpu_custom_call.1} parent=1 // pred_check_branch
      %36 = sbr.rel (0) target = $region17
    $region16: #{tpu_custom_call.1} parent=1 // pred_region
      %37 = dma.done [#allocation6], 128
    $region17: #{tpu_custom_call.1} parent=1 // pred_fallthru
      _
    %v38 = vld [vmem:[#allocation2] sm:$0xf]
    %v39 = vld [vmem:[#allocation5] sm:$0xf]
    %v40 = vld [vmem:[#allocation5 + $0x4] sm:$0xf]
    %vm41 = vcmask 31744
    %v43 = vsel %vm41, %v38, 0
    %vm45 = vcmask 1043456
    %v47 = vsel %vm45, %v39, 0
    %49 = vmatprep.subr.mxu0 0.0
    %50 = vmatpush1.msra.mxu0 0.0
    %51 = vmatprep.subr.mxu0 0.0
    %52 = vmatpush1.msra.mxu0 0.0
    %53 = vmatprep.subr.mxu0 0.0
    %54 = vmatpush1.msra.mxu0 0.0
    %55 = vmatprep.subr.mxu0 0.0
    %56 = vmatpush1.msra.mxu0 0.0
    %57 = vmatprep.subr.mxu0 0.0
    %58 = vmatpush1.msra.mxu0 0.0
    %59 = vmatprep.subr.mxu0 0.0
    %60 = vmatpush1.msra.mxu0 0.0
    %61 = vmatprep.subr.mxu0 0.0
    %62 = vmatpush1.msra.mxu0 0.0
    %63 = vmatprep.subr.mxu0 0.0
    %64 = vmatpush1.msra.mxu0 0.0
    %65 = vmatprep.subr.mxu0 0.0
    %66 = vmatpush1.msra.mxu0 0.0
    %67 = vmatprep.subr.mxu0 0.0
    %68 = vmatpush1.msra.mxu0 0.0
    %69 = vmatprep.subr.mxu0 0.0
    %70 = vmatpush1.msra.mxu0 0.0
    %71 = vmatprep.subr.mxu0 0.0
    %72 = vmatpush1.msra.mxu0 0.0
    %73 = vmatprep.subr.mxu0 0.0
    %74 = vmatpush1.msra.mxu0 0.0
    %75 = vmatprep.subr.mxu0 0.0
    %76 = vmatpush1.msra.mxu0 0.0
    %77 = vmatprep.subr.mxu0 0.0
    %78 = vmatpush1.msra.mxu0 0.0
    %79 = vmatprep.subr.mxu0 0.0
    %80 = vmatpush1.msra.mxu0 %v47
    %81 = vmatprep.subr.mxu0 0.0
    %82 = vmatpush2.msra.mxu0 0.0
    %83 = vmatprep.subr.mxu0 0.0
    %84 = vmatpush2.msra.mxu0 0.0
    %85 = vmatprep.subr.mxu0 0.0
    %86 = vmatpush2.msra.mxu0 0.0
    %87 = vmatprep.subr.mxu0 0.0
    %88 = vmatpush2.msra.mxu0 0.0
    %89 = vmatprep.subr.mxu0 0.0
    %90 = vmatpush2.msra.mxu0 0.0
    %91 = vmatprep.subr.mxu0 0.0
    %92 = vmatpush2.msra.mxu0 0.0
    %93 = vmatprep.subr.mxu0 0.0
    %94 = vmatpush2.msra.mxu0 0.0
    %95 = vmatprep.subr.mxu0 0.0
    %96 = vmatpush2.msra.mxu0 0.0
    %97 = vmatprep.subr.mxu0 0.0
    %98 = vmatpush2.msra.mxu0 0.0
    %99 = vmatprep.subr.mxu0 0.0
    %100 = vmatpush2.msra.mxu0 0.0
    %101 = vmatprep.subr.mxu0 0.0
    %102 = vmatpush2.msra.mxu0 0.0
    %103 = vmatprep.subr.mxu0 0.0
    %104 = vmatpush2.msra.mxu0 0.0
    %105 = vmatprep.subr.mxu0 0.0
    %106 = vmatpush2.msra.mxu0 0.0
    %107 = vmatprep.subr.mxu0 0.0
    %108 = vmatpush2.msra.mxu0 0.0
    %109 = vmatprep.subr.mxu0 0.0
    %110 = vmatpush2.msra.mxu0 0.0
    %111 = vmatprep.subr.mxu0 0.0
    %112 = vmatpush2.msra.mxu0 0.0
    %113 = vmatprep.mubr.f32.mxu0 0.0
    %114 = vmatmul.mubr.f32.gmra.mxu0 %v43
    %v115 = vpop.f32.mrf.mxu0
    %v116 = vadd.f32 0.0, %v115
    %v117 = vpop.f32.mrf.mxu0
    %118 = vdwg.mxu0
    %v120 = vsel %vm45, %v40, 0
    %122 = vmatprep.subr.mxu0 0.0
    %123 = vmatpush1.msra.mxu0 0.0
    %124 = vmatprep.subr.mxu0 0.0
    %125 = vmatpush1.msra.mxu0 0.0
    %126 = vmatprep.subr.mxu0 0.0
    %127 = vmatpush1.msra.mxu0 0.0
    %128 = vmatprep.subr.mxu0 0.0
    %129 = vmatpush1.msra.mxu0 0.0
    %130 = vmatprep.subr.mxu0 0.0
    %131 = vmatpush1.msra.mxu0 0.0
    %132 = vmatprep.subr.mxu0 0.0
    %133 = vmatpush1.msra.mxu0 0.0
    %134 = vmatprep.subr.mxu0 0.0
    %135 = vmatpush1.msra.mxu0 0.0
    %136 = vmatprep.subr.mxu0 0.0
    %137 = vmatpush1.msra.mxu0 0.0
    %138 = vmatprep.subr.mxu0 0.0
    %139 = vmatpush1.msra.mxu0 0.0
    %140 = vmatprep.subr.mxu0 0.0
    %141 = vmatpush1.msra.mxu0 0.0
    %142 = vmatprep.subr.mxu0 0.0
    %143 = vmatpush1.msra.mxu0 0.0
    %144 = vmatprep.subr.mxu0 0.0
    %145 = vmatpush1.msra.mxu0 0.0
    %146 = vmatprep.subr.mxu0 0.0
    %147 = vmatpush1.msra.mxu0 0.0
    %148 = vmatprep.subr.mxu0 0.0
    %149 = vmatpush1.msra.mxu0 0.0
    %150 = vmatprep.subr.mxu0 0.0
    %151 = vmatpush1.msra.mxu0 0.0
    %152 = vmatprep.subr.mxu0 0.0
    %153 = vmatpush1.msra.mxu0 %v120
    %154 = vmatprep.subr.mxu0 0.0
    %155 = vmatpush2.msra.mxu0 0.0
    %156 = vmatprep.subr.mxu0 0.0
    %157 = vmatpush2.msra.mxu0 0.0
    %158 = vmatprep.subr.mxu0 0.0
    %159 = vmatpush2.msra.mxu0 0.0
    %160 = vmatprep.subr.mxu0 0.0
    %161 = vmatpush2.msra.mxu0 0.0
    %162 = vmatprep.subr.mxu0 0.0
    %163 = vmatpush2.msra.mxu0 0.0
    %164 = vmatprep.subr.mxu0 0.0
    %165 = vmatpush2.msra.mxu0 0.0
    %166 = vmatprep.subr.mxu0 0.0
    %167 = vmatpush2.msra.mxu0 0.0
    %168 = vmatprep.subr.mxu0 0.0
    %169 = vmatpush2.msra.mxu0 0.0
    %170 = vmatprep.subr.mxu0 0.0
    %171 = vmatpush2.msra.mxu0 0.0
    %172 = vmatprep.subr.mxu0 0.0
    %173 = vmatpush2.msra.mxu0 0.0
    %174 = vmatprep.subr.mxu0 0.0
    %175 = vmatpush2.msra.mxu0 0.0
    %176 = vmatprep.subr.mxu0 0.0
    %177 = vmatpush2.msra.mxu0 0.0
    %178 = vmatprep.subr.mxu0 0.0
    %179 = vmatpush2.msra.mxu0 0.0
    %180 = vmatprep.subr.mxu0 0.0
    %181 = vmatpush2.msra.mxu0 0.0
    %182 = vmatprep.subr.mxu0 0.0
    %183 = vmatpush2.msra.mxu0 0.0
    %184 = vmatprep.subr.mxu0 0.0
    %185 = vmatpush2.msra.mxu0 0.0
    %186 = vmatprep.mubr.f32.mxu0 0.0
    %187 = vmatmul.mubr.f32.gmra.mxu0 %v43
    %v188 = vpop.f32.mrf.mxu0
    %v189 = vadd.f32 0.0, %v188
    %v190 = vpop.f32.mrf.mxu0
    %191 = vdwg.mxu0
    %vm192 = vcmask 60416
    %193 = vst.msk [vmem:[#allocation7] sm:$0xf] %vm192, %v116
    %194 = vst.msk [vmem:[#allocation7 + $0x4] sm:$0xf] %vm192, %v189
    // Predicated region
    $region18: #{tpu_custom_call.1} parent=1 // pred_check
      _
    $region19: #{tpu_custom_call.1} parent=1 // pred_check_branch
      %196 = sbr.rel (0) target = $region21
    $region20: #{tpu_custom_call.1} parent=1 // pred_region
      %s198 = ssub.s32 128, 128
      %199 = vsyncadd [#allocation4], %s198
      %s200 = sshll.u32 [#allocation7], 4
      %s201 = int_to_ptr.vmem [resolvable:$true] %s200
      %206 = dma.vmem_to_hbm [thread:$0]  %s201, 128, %s2, [#allocation4], 64, 64, 4
    $region21: #{tpu_custom_call.1} parent=1 // pred_fallthru
      _
    // Predicated region
    $region22: #{tpu_custom_call.1} parent=1 // pred_check
      _
    $region23: #{tpu_custom_call.1} parent=1 // pred_check_branch
      %208 = sbr.rel (0) target = $region25
    $region24: #{tpu_custom_call.1} parent=1 // pred_region
      %209 = dma.done [#allocation4], 128
    $region25: #{tpu_custom_call.1} parent=1 // pred_fallthru
      _
    %210 = vsyncpa [#allocation3], 1
    %211 = vsyncpa [#allocation6], 1
    %212 = vsyncpa [#allocation4], 1

</llo_original>
